<compile_context>
chip_gen: v5e
topology: v5e:2x2
jax: 0.10.0
libtpu: 0.0.40
codegen_flags: <defaults>
</compile_context>

<pallas_src>
import functools

import jax
import jax.numpy as jnp
from jax import lax
from jax.experimental import pallas as pl
from jax.experimental.pallas import tpu as pltpu


# ---------------------------------------------------------------------------
# Kernels
# ---------------------------------------------------------------------------

def _ffn_kernel_single(x_ref, w1_ref, b1_ref, w2_ref, b2_ref, o_ref):
    """hidden fits a single chunk: no accumulator scratch, direct store."""
    # x_ref: (tm, d_model), w1_ref: (d_model, hidden), b1_ref: (1, hidden)
    # w2_ref: (hidden, d_model), b2_ref: (1, d_model), o_ref: (tm, d_model)
    h = jnp.dot(x_ref[...], w1_ref[...], preferred_element_type=jnp.float32)
    h = jnp.maximum(h + b1_ref[...].astype(jnp.float32), 0.0)
    # TODO(synk): dropout(p=0.1) is identity in eval/inference mode; training
    # mode would draw pltpu.prng_random_bits here and mask/scale h.
    out = jnp.dot(h.astype(w2_ref.dtype), w2_ref[...],
                  preferred_element_type=jnp.float32)
    o_ref[...] = (out + b2_ref[...].astype(jnp.float32)).astype(o_ref.dtype)


def _ffn_kernel_multi(x_ref, w1_ref, b1_ref, w2_ref, b2_ref, o_ref, acc_ref,
                      *, resident):
    """hidden split into chunks along the last ("arbitrary") grid axis.

    resident=True : w1/b1/w2 refs hold the FULL weights stacked by chunk on a
                    leading axis (DMAed once, constant index_map); the current
                    chunk is selected with a leading-axis dynamic index.
    resident=False: the refs already hold the streamed per-chunk blocks.
    """
    k = pl.program_id(1)

    # Fold the output bias into the accumulator init on the first chunk.
    @pl.when(k == 0)
    def _():
        acc_ref[...] = jnp.broadcast_to(
            b2_ref[...].astype(jnp.float32), acc_ref.shape)

    if resident:
        w1c = w1_ref[k]        # (d_model, th)
        b1c = b1_ref[k]        # (1, th)
        w2c = w2_ref[k]        # (th, d_model)
    else:
        w1c = w1_ref[...]      # (d_model, th)
        b1c = b1_ref[...]      # (1, th)
        w2c = w2_ref[...]      # (th, d_model)

    # h = relu(x @ w1_chunk + b1_chunk)               -> (tm, th), f32
    h = jnp.dot(x_ref[...], w1c, preferred_element_type=jnp.float32)
    h = jnp.maximum(h + b1c.astype(jnp.float32), 0.0)
    # TODO(synk): dropout(p=0.1) identity (eval mode).

    # acc += h_chunk @ w2_chunk                        -> (tm, d_model), f32
    acc_ref[...] += jnp.dot(h.astype(w2c.dtype), w2c,
                            preferred_element_type=jnp.float32)

    @pl.when(k == pl.num_programs(1) - 1)
    def _():
        o_ref[...] = acc_ref[...].astype(o_ref.dtype)


# ---------------------------------------------------------------------------
# Tiling / budget helpers (all trace-time Python)
# ---------------------------------------------------------------------------

def _round_down(x, mult):
    return (x // mult) * mult


def _round_up(x, mult):
    return ((x + mult - 1) // mult) * mult


def _vmem_capacity_bytes():
    """Physical VMEM per core; falls back to the v7x minimum if unknown."""
    try:
        cap = int(getattr(pltpu.get_tpu_info(), "vmem_capacity_bytes", 0))
        if cap > 0:
            return cap
    except Exception:
        pass
    return 64 * 1024 * 1024


def _pick_row_tile(m, sub, target):
    if m <= sub:
        return m
    # Keep at least two row tiles so both v7x TensorCores receive work
    # (the row axis is the "parallel" grid axis).
    half = _round_up((m + 1) // 2, sub)
    return max(sub, min(target, half))


def _largest_aligned_divisor(hidden, cap):
    cand = _round_down(min(cap, hidden), 128)
    while cand >= 128:
        if hidden % cand == 0:
            return cand
        cand -= 128
    # Irregular hidden (no 128-multiple divisor): keep one full chunk so all
    # block shapes stay legal rather than silently corrupting the accumulator.
    # TODO(synk): pad hidden to a multiple of 128 at model-conversion time.
    return hidden


def _pick_hidden_tile(hidden, target):
    if hidden <= target:
        return hidden
    return _largest_aligned_divisor(hidden, target)


# ---------------------------------------------------------------------------
# Wrapper
# ---------------------------------------------------------------------------

def positionwise_feed_forward(x, w1, b1, w2, b2, *, compute_dtype=None,
                              weights_resident=None, row_tile=None,
                              hidden_tile=None):
    """Fused FFN: linear1 -> ReLU -> (dropout = identity) -> linear2.

    x:  (batch, seq, d_model)
    w1: (hidden, d_model), b1: (hidden,)   -- PyTorch nn.Linear layout
    w2: (d_model, hidden), b2: (d_model,)
    compute_dtype: optional MXU operand dtype (e.g. jnp.bfloat16); accumulation
                   stays f32. Default None preserves the input dtype/semantics.
    """
    batch, seq, d_model = x.shape
    hidden = w1.shape[0]
    out_dtype = x.dtype

    if compute_dtype is not None:
        x = x.astype(compute_dtype)
        w1 = w1.astype(compute_dtype)
        w2 = w2.astype(compute_dtype)

    m = batch * seq
    x2 = x.reshape(m, d_model)
    b2r = b2.reshape(1, d_model).astype(jnp.float32)

    x_item = jnp.dtype(x2.dtype).itemsize
    w_item = jnp.dtype(w1.dtype).itemsize
    out_item = jnp.dtype(out_dtype).itemsize

    # --- generation-derived VMEM budget -------------------------------------
    cap = _vmem_capacity_bytes()                      # 128 MiB v5e/v6e, 64 MiB v7x
    vmem_limit = max(32 * 1024 * 1024, int(cap * 0.75))
    usable = int(vmem_limit * 0.85)                   # headroom for Mosaic scratch

    sub = 16 if x_item < 4 else 8                     # bf16 packs 16 sublanes
    row_target = 1024 if vmem_limit >= 80 * 1024 * 1024 else 512

    if row_tile is not None:
        tm = max(1, min(int(row_tile), m))
        if m > sub:
            tm = max(sub, _round_down(tm, sub))
    else:
        tm = _pick_row_tile(m, sub, row_target)

    if hidden_tile is not None:
        th = max(1, min(int(hidden_tile), hidden))
        while hidden % th != 0:                       # chunk must divide exactly
            th -= 1
    else:
        th = _pick_hidden_tile(hidden, target=1024)

    def footprint(tm_, th_, resident_):
        f = 2 * tm_ * d_model * (x_item + out_item)   # x/out double-buffered
        f += tm_ * th_ * 4                            # h intermediate (f32)
        f += tm_ * d_model * 4                        # f32 accumulator
        f += 4 * (hidden + d_model) * 4               # biases (generous)
        w_elems = 2 * d_model * (hidden if resident_ else th_)
        f += 2 * w_elems * w_item                     # weights (x2 buffers, conservative)
        return f

    if weights_resident is None:
        resident = footprint(tm, th, True) <= usable
        if not resident and th == hidden and hidden > 128:
            # Weights alone blow the budget: stream modest chunks instead.
            th = _largest_aligned_divisor(hidden, 512)
    else:
        resident = bool(weights_resident)

    # Shrink tiles until we fit the budget (th stays a 128-multiple divisor).
    while footprint(tm, th, resident) > usable and tm > sub:
        tm = max(sub, _round_down(max(tm // 2, sub), sub))
    while footprint(tm, th, resident) > usable and th % 256 == 0:
        th //= 2

    nk = hidden // th
    grid_rows = pl.cdiv(m, tm)

    cost = pl.CostEstimate(
        flops=4 * m * d_model * hidden,
        transcendentals=0,
        bytes_accessed=(m * d_model * (x_item + out_item)
                        + 2 * d_model * hidden * w_item
                        + 4 * (hidden + d_model)),
    )

    # Plain (K, N) operand layouts so both matmuls are (M,K)x(K,N) with
    # lane-dense outputs (no trans_b -> no Mosaic vxpose on weight tiles).
    # TODO(synk): in a real deployment do this relayout once at model-conversion
    # time instead of per call.
    if nk == 1:
        # hidden fits a single chunk: weights trivially resident, no scratch.
        w1_in = jnp.transpose(w1)                     # (d_model, hidden)
        w2_in = jnp.transpose(w2)                     # (hidden, d_model)
        b1_in = b1.reshape(1, hidden).astype(jnp.float32)
        kernel = _ffn_kernel_single
        grid = (grid_rows,)
        in_specs = [
            pl.BlockSpec((tm, d_model), lambda i: (i, 0)),        # x rows
            pl.BlockSpec((d_model, hidden), lambda i: (0, 0)),    # w1 (resident)
            pl.BlockSpec((1, hidden), lambda i: (0, 0)),          # b1
            pl.BlockSpec((hidden, d_model), lambda i: (0, 0)),    # w2 (resident)
            pl.BlockSpec((1, d_model), lambda i: (0, 0)),         # b2
        ]
        out_specs = pl.BlockSpec((tm, d_model), lambda i: (i, 0))
        scratch_shapes = []
        # TODO(synk): on v7x verify megacore sharding in a trace; switch the row
        # axis to pltpu.CORE_PARALLEL if "parallel" does not shard across TCs.
        dim_sem = ("parallel",)
    else:
        kernel = functools.partial(_ffn_kernel_multi, resident=resident)
        grid = (grid_rows, nk)
        if resident:
            # Stack weights by hidden chunk on a leading axis: constant
            # index_map -> one HBM fetch total; the kernel selects the chunk
            # with a leading-axis dynamic index.
            # TODO(synk): on v7x place resident weights in pltpu.VMEM_SHARED so
            # both TensorCores share one copy.
            w1_in = w1.reshape(nk, th, d_model).transpose(0, 2, 1)  # (nk, d_model, th)
            w2_in = jnp.transpose(w2).reshape(nk, th, d_model)      # (nk, th, d_model)
            b1_in = b1.reshape(nk, 1, th).astype(jnp.float32)
            w1_spec = pl.BlockSpec((nk, d_model, th), lambda i, k: (0, 0, 0))
            b1_spec = pl.BlockSpec((nk, 1, th), lambda i, k: (0, 0, 0))
            w2_spec = pl.BlockSpec((nk, th, d_model), lambda i, k: (0, 0, 0))
        else:
            # Streaming fallback for weights too large for the VMEM budget.
            w1_in = jnp.transpose(w1)                               # (d_model, hidden)
            w2_in = jnp.transpose(w2)                               # (hidden, d_model)
            b1_in = b1.reshape(1, hidden).astype(jnp.float32)
            w1_spec = pl.BlockSpec((d_model, th), lambda i, k: (0, k))
            b1_spec = pl.BlockSpec((1, th), lambda i, k: (0, k))
            w2_spec = pl.BlockSpec((th, d_model), lambda i, k: (k, 0))
        in_specs = [
            pl.BlockSpec((tm, d_model), lambda i, k: (i, 0)),       # x rows
            w1_spec, b1_spec, w2_spec,
            pl.BlockSpec((1, d_model), lambda i, k: (0, 0)),        # b2
        ]
        out_specs = pl.BlockSpec((tm, d_model), lambda i, k: (i, 0))
        scratch_shapes = [pltpu.VMEM((tm, d_model), jnp.float32)]
        dim_sem = ("parallel", "arbitrary")

    out = pl.pallas_call(
        kernel,
        out_shape=jax.ShapeDtypeStruct((m, d_model), out_dtype),
        grid_spec=pltpu.PrefetchScalarGridSpec(
            num_scalar_prefetch=0,
            grid=grid,
            in_specs=in_specs,
            out_specs=out_specs,
            scratch_shapes=scratch_shapes,
        ),
        compiler_params=pltpu.CompilerParams(
            dimension_semantics=dim_sem,
            vmem_limit_bytes=vmem_limit,
        ),
        cost_estimate=cost,
    )(x2, w1_in, b1_in, w2_in, b2r)

    return out.reshape(batch, seq, d_model)


# ---------------------------------------------------------------------------
# Reference & self-test
# ---------------------------------------------------------------------------

def reference_ffn(x, w1, b1, w2, b2):
    hp = lax.Precision.HIGHEST
    h = jnp.maximum(jnp.einsum("bsd,hd->bsh", x, w1, precision=hp) + b1, 0.0)
    return jnp.einsum("bsh,dh->bsd", h, w2, precision=hp) + b2


if __name__ == "__main__":
    def run_case(batch, seq, d_model, hidden, **kwargs):
        key = jax.random.PRNGKey(0)
        kx, k1, k2, k3, k4 = jax.random.split(key, 5)
        x = jax.random.normal(kx, (batch, seq, d_model), dtype=jnp.float32)
        # Deterministic params; shapes match nn.Linear in the module.
        w1 = jax.random.normal(k1, (hidden, d_model), dtype=jnp.float32) * 0.1
        b1 = jax.random.normal(k2, (hidden,), dtype=jnp.float32) * 0.1
        w2 = jax.random.normal(k3, (d_model, hidden), dtype=jnp.float32) * 0.1
        b2 = jax.random.normal(k4, (d_model,), dtype=jnp.float32) * 0.1

        out = jax.block_until_ready(
            positionwise_feed_forward(x, w1, b1, w2, b2, **kwargs))
        ref = reference_ffn(x, w1, b1, w2, b2)
        assert out.shape == (batch, seq, d_model)
        err = float(jnp.max(jnp.abs(out - ref)))
        assert jnp.allclose(out, ref, atol=2e-4, rtol=2e-4), f"max err {err}"

    # 1) module-default tiny shapes -> single-chunk path (no acc scratch).
    run_case(2, 8, 16, 32)
    # 2) multi-chunk reduction with VMEM-resident stacked weights.
    run_case(2, 64, 128, 256, row_tile=64, hidden_tile=128,
             weights_resident=True)
    # 3) multi-chunk reduction with streamed weight chunks (large-weight fallback).
    run_case(2, 64, 128, 256, row_tile=64, hidden_tile=128,
             weights_resident=False)

    print("KERNEL_OK")
</pallas_src>

<mosaic_0001>
module attributes {stable_mosaic.version = 11 : i64} {
  func.func @_ffn_kernel_single(%arg0: i32, %arg1: memref<8x16xf32, #tpu.memory_space<vmem>>, %arg2: memref<16x32xf32, #tpu.memory_space<vmem>>, %arg3: memref<1x32xf32, #tpu.memory_space<vmem>>, %arg4: memref<32x16xf32, #tpu.memory_space<vmem>>, %arg5: memref<1x16xf32, #tpu.memory_space<vmem>>, %arg6: memref<8x16xf32, #tpu.memory_space<vmem>>) attributes {dimension_semantics = [#tpu.dimension_semantics<parallel>], iteration_bounds = array<i64: 2>, scalar_prefetch = 0 : i64, scratch_operands = 0 : i64, tpu.core_type = #tpu.core_type<tc>, window_params = [{transform_indices = @transform_0, window_bounds = array<i64: 8, 16>}, {pipeline_mode = #tpu.pipeline_mode<synchronous>, transform_indices = @transform_1, window_bounds = array<i64: 16, 32>}, {pipeline_mode = #tpu.pipeline_mode<synchronous>, transform_indices = @transform_2, window_bounds = array<i64: 1, 32>}, {pipeline_mode = #tpu.pipeline_mode<synchronous>, transform_indices = @transform_3, window_bounds = array<i64: 32, 16>}, {pipeline_mode = #tpu.pipeline_mode<synchronous>, transform_indices = @transform_4, window_bounds = array<i64: 1, 16>}, {transform_indices = @transform_5, window_bounds = array<i64: 8, 16>}]} {
    %c0 = arith.constant 0 : index
    %c0_0 = arith.constant 0 : index
    %0 = vector.load %arg1[%c0, %c0_0] : memref<8x16xf32, #tpu.memory_space<vmem>>, vector<8x16xf32>
    %c0_1 = arith.constant 0 : index
    %c0_2 = arith.constant 0 : index
    %1 = vector.load %arg2[%c0_1, %c0_2] : memref<16x32xf32, #tpu.memory_space<vmem>>, vector<16x32xf32>
    %cst = arith.constant dense<0.000000e+00> : vector<8x32xf32>
    %2 = tpu.matmul %0, %1, %cst {dimension_numbers = #tpu.dot_dimension_numbers<[1], [0], [0], [1], [0, 0, 1, 1], [], []>} : vector<8x16xf32>, vector<16x32xf32>, vector<8x32xf32> -> vector<8x32xf32>
    %c0_3 = arith.constant 0 : index
    %c0_4 = arith.constant 0 : index
    %3 = vector.load %arg3[%c0_3, %c0_4] : memref<1x32xf32, #tpu.memory_space<vmem>>, vector<1x32xf32>
    %4 = vector.broadcast %3 : vector<1x32xf32> to vector<8x32xf32>
    %5 = arith.addf %2, %4 : vector<8x32xf32>
    %cst_5 = arith.constant 0.000000e+00 : f32
    %6 = vector.broadcast %cst_5 : f32 to vector<8x32xf32>
    %7 = arith.maximumf %5, %6 : vector<8x32xf32>
    %c0_6 = arith.constant 0 : index
    %c0_7 = arith.constant 0 : index
    %8 = vector.load %arg4[%c0_6, %c0_7] : memref<32x16xf32, #tpu.memory_space<vmem>>, vector<32x16xf32>
    %cst_8 = arith.constant dense<0.000000e+00> : vector<8x16xf32>
    %9 = tpu.matmul %7, %8, %cst_8 {dimension_numbers = #tpu.dot_dimension_numbers<[1], [0], [0], [1], [0, 0, 1, 1], [], []>} : vector<8x32xf32>, vector<32x16xf32>, vector<8x16xf32> -> vector<8x16xf32>
    %c0_9 = arith.constant 0 : index
    %c0_10 = arith.constant 0 : index
    %10 = vector.load %arg5[%c0_9, %c0_10] : memref<1x16xf32, #tpu.memory_space<vmem>>, vector<1x16xf32>
    %11 = vector.broadcast %10 : vector<1x16xf32> to vector<8x16xf32>
    %12 = arith.addf %9, %11 : vector<8x16xf32>
    %c0_11 = arith.constant 0 : index
    %c0_12 = arith.constant 0 : index
    %13 = vector.load %arg6[%c0_11, %c0_12] : memref<8x16xf32, #tpu.memory_space<vmem>>, vector<8x16xf32>
    tpu.vector_store %arg6[%c0_11, %c0_12], %12 {strides = array<i32>} : memref<8x16xf32, #tpu.memory_space<vmem>>, vector<8x16xf32>,
    return
  }
  func.func @transform_0(%arg0: i32) -> (i32, i32) {
    %c0_i32 = arith.constant 0 : i32
    %c0_i32_0 = arith.constant 0 : i32
    return %arg0, %c0_i32 : i32, i32
  }
  func.func @transform_1(%arg0: i32) -> (i32, i32) {
    %c0_i32 = arith.constant 0 : i32
    %c0_i32_0 = arith.constant 0 : i32
    %c0_i32_1 = arith.constant 0 : i32
    return %c0_i32, %c0_i32_0 : i32, i32
  }
  func.func @transform_2(%arg0: i32) -> (i32, i32) {
    %c0_i32 = arith.constant 0 : i32
    %c0_i32_0 = arith.constant 0 : i32
    %c0_i32_1 = arith.constant 0 : i32
    return %c0_i32, %c0_i32_0 : i32, i32
  }
  func.func @transform_3(%arg0: i32) -> (i32, i32) {
    %c0_i32 = arith.constant 0 : i32
    %c0_i32_0 = arith.constant 0 : i32
    %c0_i32_1 = arith.constant 0 : i32
    return %c0_i32, %c0_i32_0 : i32, i32
  }
  func.func @transform_4(%arg0: i32) -> (i32, i32) {
    %c0_i32 = arith.constant 0 : i32
    %c0_i32_0 = arith.constant 0 : i32
    %c0_i32_1 = arith.constant 0 : i32
    return %c0_i32, %c0_i32_0 : i32, i32
  }
  func.func @transform_5(%arg0: i32) -> (i32, i32) {
    %c0_i32 = arith.constant 0 : i32
    %c0_i32_0 = arith.constant 0 : i32
    return %arg0, %c0_i32 : i32, i32
  }
}

</mosaic_0001>

<llo_original>
// kernel: tpu_custom_call.1
$region0: #{tpu_custom_call.1}
  #allocation0 [shape = 'u32[]', space=smem, size = 0x4, offset = 0x4, fixed_abs, tag = 'smem constant byte address 0x4 - core index']
  #allocation1 [shape = 'u32[72,128]{1,0:T(1,128)}', space=vmem, size = 0x9000, scoped, tag = 'internal scratch']
  %s0 = inlined_call_operand.vmem [shape: f32[16,16], index: 0, kind: input, shape index: {}]
  %s1 = inlined_call_operand.vmem [shape: f32[16,32], index: 1, kind: input, shape index: {}]
  %s2 = inlined_call_operand.vmem [shape: f32[1,32], index: 2, kind: input, shape index: {}]
  %s3 = inlined_call_operand.vmem [shape: f32[32,16], index: 3, kind: input, shape index: {}]
  %s4 = inlined_call_operand.vmem [shape: f32[1,16], index: 4, kind: input, shape index: {}]
  %s5 = inlined_call_operand.hbm [shape: f32[16,16], index: 5, kind: output, shape index: {}]
  %s6 = sld [smem:[#allocation0]]
  $region53: #{tpu_custom_call.1} parent=0
    _
  %s8 = ssub.s32 1, %s6
  %s9 = scalar_select 0, %s8, %s6
  $region1: #{tpu_custom_call.1} parent=0
    #allocation2 [shape = 'u8[8192]{0}', space=vmem, size = 0x2000, scoped, tag = 'output window, operand 0']
    #allocation3 [shape = 's32[2]{0}', space=sflag, size = 0x8, scoped, tag = 'scoped memory for tpu_custom_call.1']
    %10 = vsyncpa [#allocation3], 0
    %s11 = scalar_lea.sflag [#allocation3], 1
    %12 = vsyncpa %s11, 0
    loop: start=0, step=1, limit=4
    $region2: #{tpu_custom_call.1} parent=1 // loop_pre_header
      _
    $region3: #{tpu_custom_call.1} parent=1 // loop_header
      %s14 = sphi 0, %s18
      %p15 = scmp.ge.s32.totalorder %s14, 4
      %s24 = sphi 0, %s26
      %s27 = sphi 0, %s24
      %s28 = sphi 0, %s27
      %s44 = sphi 0, %s28
      %s48 = sphi 0, %s48
      %s50 = sphi 0, %s48
      %s51 = sphi 0, %s50
      %s65 = sphi 0, %s51
      %s69 = sphi 0, %s69
      %s71 = sphi 0, %s69
      %s72 = sphi 0, %s71
      %s86 = sphi 0, %s72
      %s90 = sphi 0, %s90
      %s92 = sphi 0, %s90
      %s93 = sphi 0, %s92
      %s107 = sphi 0, %s93
      %s111 = sphi 0, %s111
      %s113 = sphi 0, %s111
      %s114 = sphi 0, %s113
      %s128 = sphi 0, %s114
      %s134 = sphi 0, %s136
      %s137 = sphi 0, %s134
      %s138 = sphi 0, %s137
      %s154 = sphi 0, %s138
    $region4: #{tpu_custom_call.1} parent=1 // loop_header_branch
      %17 = sbr.rel (%p15) target = $region8
    $region5: #{tpu_custom_call.1} parent=1 // loop_body
      %s19 = ssub.s32 %s14, 1
      %s20 = ssub.s32 %s14, 2
      %s21 = sadd.s32 %s14, 1
      %s22 = ssub.s32 %s14, %s21
      %p23 = scmp.eq.s32.totalorder %s22, 0
      %s25 = sadd.s32 %s24, 1
      %s26 = scalar_select %p23, %s24, %s25
      %p29 = pneg %p23
      %p30 = scmp.eq.s32.totalorder %s14, 1
      %p31 = por %p29, %p30
      %p32 = scmp.ne.s32.totalorder %s24, %s27
      %p33 = scmp.eq.s32.totalorder %s14, 0
      %p34 = por %p32, %p33
      %p35 = scmp.ne.s32.totalorder %s24, %s27
      %p36 = scmp.eq.s32.totalorder %s19, 1
      %p37 = por %p35, %p36
      %p38 = scmp.ne.s32.totalorder %s27, %s28
      %p39 = scmp.eq.s32.totalorder %s19, 0
      %p40 = por %p38, %p39
      %p41 = scmp.ne.s32.totalorder %s27, %s28
      %p42 = scmp.eq.s32.totalorder %s20, 1
      %p43 = por %p41, %p42
      %p45 = scmp.ne.s32.totalorder %s28, %s44
      %p46 = scmp.eq.s32.totalorder %s20, 0
      %p47 = por %p45, %p46
      %s49 = sadd.s32 %s48, 1
      %p52 = scmp.eq.s32.totalorder %s14, 1
      %p53 = scmp.ne.s32.totalorder %s48, %s50
      %p54 = scmp.eq.s32.totalorder %s14, 0
      %p55 = por %p53, %p54
      %p56 = scmp.ne.s32.totalorder %s48, %s50
      %p57 = scmp.eq.s32.totalorder %s19, 1
      %p58 = por %p56, %p57
      %p59 = scmp.ne.s32.totalorder %s50, %s51
      %p60 = scmp.eq.s32.totalorder %s19, 0
      %p61 = por %p59, %p60
      %p62 = scmp.ne.s32.totalorder %s50, %s51
      %p63 = scmp.eq.s32.totalorder %s20, 1
      %p64 = por %p62, %p63
      %p66 = scmp.ne.s32.totalorder %s51, %s65
      %p67 = scmp.eq.s32.totalorder %s20, 0
      %p68 = por %p66, %p67
      %s70 = sadd.s32 %s69, 1
      %p73 = scmp.eq.s32.totalorder %s14, 1
      %p74 = scmp.ne.s32.totalorder %s69, %s71
      %p75 = scmp.eq.s32.totalorder %s14, 0
      %p76 = por %p74, %p75
      %p77 = scmp.ne.s32.totalorder %s69, %s71
      %p78 = scmp.eq.s32.totalorder %s19, 1
      %p79 = por %p77, %p78
      %p80 = scmp.ne.s32.totalorder %s71, %s72
      %p81 = scmp.eq.s32.totalorder %s19, 0
      %p82 = por %p80, %p81
      %p83 = scmp.ne.s32.totalorder %s71, %s72
      %p84 = scmp.eq.s32.totalorder %s20, 1
      %p85 = por %p83, %p84
      %p87 = scmp.ne.s32.totalorder %s72, %s86
      %p88 = scmp.eq.s32.totalorder %s20, 0
      %p89 = por %p87, %p88
      %s91 = sadd.s32 %s90, 1
      %p94 = scmp.eq.s32.totalorder %s14, 1
      %p95 = scmp.ne.s32.totalorder %s90, %s92
      %p96 = scmp.eq.s32.totalorder %s14, 0
      %p97 = por %p95, %p96
      %p98 = scmp.ne.s32.totalorder %s90, %s92
      %p99 = scmp.eq.s32.totalorder %s19, 1
      %p100 = por %p98, %p99
      %p101 = scmp.ne.s32.totalorder %s92, %s93
      %p102 = scmp.eq.s32.totalorder %s19, 0
      %p103 = por %p101, %p102
      %p104 = scmp.ne.s32.totalorder %s92, %s93
      %p105 = scmp.eq.s32.totalorder %s20, 1
      %p106 = por %p104, %p105
      %p108 = scmp.ne.s32.totalorder %s93, %s107
      %p109 = scmp.eq.s32.totalorder %s20, 0
      %p110 = por %p108, %p109
      %s112 = sadd.s32 %s111, 1
      %p115 = scmp.eq.s32.totalorder %s14, 1
      %p116 = scmp.ne.s32.totalorder %s111, %s113
      %p117 = scmp.eq.s32.totalorder %s14, 0
      %p118 = por %p116, %p117
      %p119 = scmp.ne.s32.totalorder %s111, %s113
      %p120 = scmp.eq.s32.totalorder %s19, 1
      %p121 = por %p119, %p120
      %p122 = scmp.ne.s32.totalorder %s113, %s114
      %p123 = scmp.eq.s32.totalorder %s19, 0
      %p124 = por %p122, %p123
      %p125 = scmp.ne.s32.totalorder %s113, %s114
      %p126 = scmp.eq.s32.totalorder %s20, 1
      %p127 = por %p125, %p126
      %p129 = scmp.ne.s32.totalorder %s114, %s128
      %p130 = scmp.eq.s32.totalorder %s20, 0
      %p131 = por %p129, %p130
      %s132 = ssub.s32 %s14, %s21
      %p133 = scmp.eq.s32.totalorder %s132, 0
      %s135 = sadd.s32 %s134, 1
      %s136 = scalar_select %p133, %s134, %s135
      %p139 = pneg %p133
      %p140 = scmp.eq.s32.totalorder %s14, 1
      %p141 = por %p139, %p140
      %p142 = scmp.ne.s32.totalorder %s134, %s137
      %p143 = scmp.eq.s32.totalorder %s14, 0
      %p144 = por %p142, %p143
      %p145 = scmp.ne.s32.totalorder %s134, %s137
      %p146 = scmp.eq.s32.totalorder %s19, 1
      %p147 = por %p145, %p146
      %p148 = scmp.ne.s32.totalorder %s137, %s138
      %p149 = scmp.eq.s32.totalorder %s19, 0
      %p150 = por %p148, %p149
      %p151 = scmp.ne.s32.totalorder %s137, %s138
      %p152 = scmp.eq.s32.totalorder %s20, 1
      %p153 = por %p151, %p152
      %p155 = scmp.ne.s32.totalorder %s138, %s154
      %p156 = scmp.eq.s32.totalorder %s20, 0
      %p157 = por %p155, %p156
      %p158 = scmp.le.s32.totalorder 1, %s14
      %p159 = scmp.lt.s32.totalorder %s14, 3
      %p160 = pnand %p158, %p159
      %p161 = pneg %p160
      // Predicated region
      $region9: #{tpu_custom_call.1} parent=5 // pred_check
        _
      $region10: #{tpu_custom_call.1} parent=5 // pred_check_branch
        %163 = sbr.rel (%p160) target = $region12
      $region11: #{tpu_custom_call.1} parent=5 // pred_region
        %s164 = ssub.s32 %s14, 1
        // Predicated region
        $region13: #{tpu_custom_call.1} parent=11 // pred_check
          %p165 = pneg %p61
        $region14: #{tpu_custom_call.1} parent=11 // pred_check_branch
          %167 = sbr.rel (%p165) target = $region16
        $region15: #{tpu_custom_call.1} parent=11 // pred_region
          _
        $region16: #{tpu_custom_call.1} parent=11 // pred_fallthru
          _
        // Predicated region
        $region17: #{tpu_custom_call.1} parent=11 // pred_check
          %p168 = pneg %p82
        $region18: #{tpu_custom_call.1} parent=11 // pred_check_branch
          %170 = sbr.rel (%p168) target = $region20
        $region19: #{tpu_custom_call.1} parent=11 // pred_region
          _
        $region20: #{tpu_custom_call.1} parent=11 // pred_fallthru
          _
        // Predicated region
        $region21: #{tpu_custom_call.1} parent=11 // pred_check
          %p171 = pneg %p103
        $region22: #{tpu_custom_call.1} parent=11 // pred_check_branch
          %173 = sbr.rel (%p171) target = $region24
        $region23: #{tpu_custom_call.1} parent=11 // pred_region
          _
        $region24: #{tpu_custom_call.1} parent=11 // pred_fallthru
          _
        // Predicated region
        $region25: #{tpu_custom_call.1} parent=11 // pred_check
          %p174 = pneg %p124
        $region26: #{tpu_custom_call.1} parent=11 // pred_check_branch
          %176 = sbr.rel (%p174) target = $region28
        $region27: #{tpu_custom_call.1} parent=11 // pred_region
          _
        $region28: #{tpu_custom_call.1} parent=11 // pred_fallthru
          _
      $region12: #{tpu_custom_call.1} parent=5 // pred_fallthru
        _
      %p177 = scmp.lt.s32.totalorder %s14, 2
      // Predicated region
      $region29: #{tpu_custom_call.1} parent=5 // pred_check
        %p178 = pneg %p177
      $region30: #{tpu_custom_call.1} parent=5 // pred_check_branch
        %180 = sbr.rel (%p178) target = $region32
      $region31: #{tpu_custom_call.1} parent=5 // pred_region
        // Predicated region
        $region33: #{tpu_custom_call.1} parent=31 // pred_check
          %p181 = pneg %p34
        $region34: #{tpu_custom_call.1} parent=31 // pred_check_branch
          %183 = sbr.rel (%p181) target = $region36
        $region35: #{tpu_custom_call.1} parent=31 // pred_region
          %p184 = scmp.lt.s32.totalorder %s14, 1
          %s185 = scalar_select %p184, %s14, 1
          %s186 = smul.addr %s185, 8
          %s187 = scalar_lea.vmem %s0, %s186
        $region36: #{tpu_custom_call.1} parent=31 // pred_fallthru
          _
      $region32: #{tpu_custom_call.1} parent=5 // pred_fallthru
        _
      %p188 = scmp.le.s32.totalorder 1, %s14
      %p189 = scmp.lt.s32.totalorder %s14, 3
      %p190 = pnand %p188, %p189
      %p191 = pneg %p190
      // Predicated region
      $region37: #{tpu_custom_call.1} parent=5 // pred_check
        _
      $region38: #{tpu_custom_call.1} parent=5 // pred_check_branch
        %193 = sbr.rel (%p190) target = $region40
      $region39: #{tpu_custom_call.1} parent=5 // pred_region
        %s194 = ssub.s32 %s14, 1
        %p195 = scmp.lt.s32.totalorder %s19, 1
        %s196 = scalar_select %p195, %s19, 1
        %s197 = smul.addr %s196, 8
        %s198 = scalar_lea.vmem %s0, %s197
        %p199 = pneg %p40
        %p200 = pneg %p37
        %p201 = pneg %p61
        %p202 = pneg %p58
        %p203 = pneg %p82
        %p204 = pneg %p79
        %p205 = pneg %p103
        %p206 = pneg %p100
        %p207 = pneg %p124
        %p208 = pneg %p121
        %p209 = pneg %p150
        %p210 = pneg %p147
        %s211 = sand.u32 %s137, 1
        %s212 = scalar_lea.sflag [#allocation3], %s211
        %s213 = sand.u32 %s137, 1
        %s214 = smul.addr %s213, 8
        %s215 = scalar_lea.vmem [#allocation2], %s214
        %p216 = scmp.lt.s32.totalorder %s19, 1
        %s217 = scalar_select %p216, %s19, 1
        %s218 = smul.addr %s217, 8
        %s219 = scalar_lea.vmem %s0, %s218
        %v220 = vld [vmem:[%s219] sm:$0xff]
        %v221 = vld [vmem:[%s1] sm:$0xff]
        %v222 = vld [vmem:[%s1 + $0x8] sm:$0xff]
        %v223 = vld [vmem:[%s2] sm:$0x1]
        %v225 = vperm.slane %v223, 0
        %vm227 = vcmask 130048
        %v229 = vsel %vm227, %v220, 0
        %231 = vmatpush.msra.mxu0 0.0
        %232 = vmatpush.msra.mxu0 0.0
        %233 = vmatpush.msra.mxu0 0.0
        %234 = vmatpush.msra.mxu0 0.0
        %235 = vmatpush.msra.mxu0 0.0
        %236 = vmatpush.msra.mxu0 0.0
        %237 = vmatpush.msra.mxu0 0.0
        %238 = vmatpush.msra.mxu0 0.0
        %239 = vmatpush.msra.mxu0 0.0
        %240 = vmatpush.msra.mxu0 0.0
        %241 = vmatpush.msra.mxu0 0.0
        %242 = vmatpush.msra.mxu0 0.0
        %243 = vmatpush.msra.mxu0 0.0
        %244 = vmatpush.msra.mxu0 0.0
        %245 = vmatpush.msra.mxu0 %v222
        %246 = vmatpush.msra.mxu0 %v221
        %247 = vmatmul.f32.gmra.mxu0 %v229
        %v248 = vpop.f32.mrf.mxu0
        %v249 = vadd.f32 %v225, %v248
        %250 = vdwg.mxu0
        %v251 = vmax.f32 %v249, 0.0
        %v252 = vld [vmem:[%s3] sm:$0xff]
        %v253 = vld [vmem:[%s3 + $0x8] sm:$0xff]
        %v254 = vld [vmem:[%s3 + $0x10] sm:$0xff]
        %v255 = vld [vmem:[%s3 + $0x18] sm:$0xff]
        %v256 = vld [vmem:[%s4] sm:$0x1]
        %v258 = vperm.slane %v256, 0
        %vm260 = vcmask 261120
        %v262 = vsel %vm260, %v251, 0
        %264 = vmatpush.msra.mxu0 0.0
        %265 = vmatpush.msra.mxu0 0.0
        %266 = vmatpush.msra.mxu0 0.0
        %267 = vmatpush.msra.mxu0 0.0
        %268 = vmatpush.msra.mxu0 0.0
        %269 = vmatpush.msra.mxu0 0.0
        %270 = vmatpush.msra.mxu0 0.0
        %271 = vmatpush.msra.mxu0 0.0
        %272 = vmatpush.msra.mxu0 0.0
        %273 = vmatpush.msra.mxu0 0.0
        %274 = vmatpush.msra.mxu0 0.0
        %275 = vmatpush.msra.mxu0 0.0
        %276 = vmatpush.msra.mxu0 %v255
        %277 = vmatpush.msra.mxu0 %v254
        %278 = vmatpush.msra.mxu0 %v253
        %279 = vmatpush.msra.mxu0 %v252
        %280 = vmatmul.f32.gmra.mxu0 %v262
        %v281 = vpop.f32.mrf.mxu0
        %v282 = vadd.f32 %v258, %v281
        %283 = vdwg.mxu0
        %284 = vst.msk [vmem:[%s215] sm:$0xff] %vm227, %v282
        %s285 = sand.u32 %s137, 1
        %s286 = scalar_lea.sflag [#allocation3], %s285
        %s287 = sand.u32 %s137, 1
        %s288 = smul.addr %s287, 8
        %s289 = scalar_lea.vmem [#allocation2], %s288
        // Predicated region
        $region41: #{tpu_custom_call.1} parent=39 // pred_check
          %p290 = pneg %p147
        $region42: #{tpu_custom_call.1} parent=39 // pred_check_branch
          %292 = sbr.rel (%p290) target = $region44
        $region43: #{tpu_custom_call.1} parent=39 // pred_region
          %294 = vsyncadd %s286, 0
          %s295 = smul.addr %s19, 8
          %s296 = scalar_lea.hbm %s5, %s295
          %s298 = sshll.u32 %s289, 4
          %s299 = int_to_ptr.vmem [resolvable:$true] %s298
          %s300 = sshll.u32 %s296, 4
          %s301 = int_to_ptr.hbm [resolvable:$true] %s300
          %303 = dma.vmem_to_hbm [thread:$0]  %s299, 128, %s301, %s286
        $region44: #{tpu_custom_call.1} parent=39 // pred_fallthru
          _
      $region40: #{tpu_custom_call.1} parent=5 // pred_fallthru
        _
      %p304 = scmp.le.s32.totalorder 2, %s14
      // Predicated region
      $region45: #{tpu_custom_call.1} parent=5 // pred_check
        %p305 = pneg %p304
      $region46: #{tpu_custom_call.1} parent=5 // pred_check_branch
        %307 = sbr.rel (%p305) target = $region48
      $region47: #{tpu_custom_call.1} parent=5 // pred_region
        %s308 = ssub.s32 %s14, 2
        // Predicated region
        $region49: #{tpu_custom_call.1} parent=47 // pred_check
          %p309 = pneg %p153
        $region50: #{tpu_custom_call.1} parent=47 // pred_check_branch
          %311 = sbr.rel (%p309) target = $region52
        $region51: #{tpu_custom_call.1} parent=47 // pred_region
          %s312 = sand.u32 %s138, 1
          %s313 = scalar_lea.sflag [#allocation3], %s312
          %s314 = sand.u32 %s138, 1
          %s315 = smul.addr %s314, 8
          %s316 = scalar_lea.vmem [#allocation2], %s315
          %318 = dma.done %s313, 128
        $region52: #{tpu_custom_call.1} parent=47 // pred_fallthru
          _
      $region48: #{tpu_custom_call.1} parent=5 // pred_fallthru
        _
    $region6: #{tpu_custom_call.1} parent=1 // loop_footer
      %s18 = sadd.s32 1, %s14
    $region7: #{tpu_custom_call.1} parent=1 // loop_footer_branch
      %13 = sbr.rel target = $region3
    $region8: #{tpu_custom_call.1} parent=1 // loop_exit
      _
    %319 = vsyncpa [#allocation3], 1
    %s320 = scalar_lea.sflag [#allocation3], 1
    %321 = vsyncpa %s320, 1

</llo_original>
